<compile_context>
chip_gen: v6e
topology: v6e:2x2x1
jax: 0.10.0
libtpu: 0.0.40
codegen_flags: <defaults>
</compile_context>

<pallas_src>
import functools

import jax
import jax.numpy as jnp
from jax.experimental import pallas as pl
from jax.experimental.pallas import tpu as pltpu

THRESH = 0.5
EPS = 1e-5

# Tiled-path row-block target (bytes of one padded x block).  ~4 MiB keeps
# 2x in + 2x out + f32 temps under a 32 MiB scoped-VMEM limit on v5e/v6e/v7x
# while reaching ~85%+ of the measured HBM roofline for tiled copies.
_TILE_TARGET_BYTES = 4 * 1024 * 1024
# Fast-path limit: f32-equivalent bytes of one whole per-group slab
# (in + out double-buffered + f32 temporaries stay well under 32 MiB).
_FAST_PATH_F32_BYTES = 4 * 1024 * 1024
_VMEM_LIMIT_BYTES = 32 * 1024 * 1024


def _bn_resident_kernel(x_ref, w_ref, b_ref, o_ref, *, inv_m):
    """Single-pass BN on a fully VMEM-resident (N, Cg, HW) slab (fast path)."""
    x = x_ref[...].astype(jnp.float32)                                # (N, Cg, HW)
    s = jnp.sum(jnp.sum(x, axis=2, keepdims=True), axis=0, keepdims=True)
    mean = s * inv_m                                                  # (1, Cg, 1)
    d = x - mean
    v = jnp.sum(jnp.sum(d * d, axis=2, keepdims=True), axis=0, keepdims=True)
    var = v * inv_m                                                   # exact 2-pass
    scale = w_ref[...][None] * jax.lax.rsqrt(var + EPS)
    o_ref[...] = (d * scale + b_ref[...][None]).astype(o_ref.dtype)


def _bn_stats_kernel(x_ref, w_ref, b_ref, scale_ref, shift_ref,
                     sum_ref, sq_ref, *, inv_m, n_rows, n_tile, ragged):
    """Tiled stats pass: accumulate per-lane sum / sumsq, finalize scale/shift."""
    i = pl.program_id(1)

    @pl.when(i == 0)
    def _init():
        sum_ref[...] = jnp.zeros_like(sum_ref)
        sq_ref[...] = jnp.zeros_like(sq_ref)

    x = x_ref[...].astype(jnp.float32)                                # (n_tile, Cg, HW)
    if ragged:
        # Mask rows past N on the last (partial) tile; where() is a select so
        # stale/garbage padding never propagates NaN into the sums.
        rows = jax.lax.broadcasted_iota(jnp.int32, x.shape, 0) + i * n_tile
        x = jnp.where(rows < n_rows, x, 0.0)

    # VPU-only row reduction per tile; the cross-lane (XLU) reduce happens
    # exactly once in the finalize step below.
    sum_ref[...] += jnp.sum(x, axis=0)                                # (Cg, HW)
    sq_ref[...] += jnp.sum(x * x, axis=0)

    @pl.when(i == pl.num_programs(1) - 1)
    def _finalize():
        tot = jnp.sum(sum_ref[...], axis=1, keepdims=True)            # (Cg, 1)
        tsq = jnp.sum(sq_ref[...], axis=1, keepdims=True)
        mean = tot * inv_m
        var = jnp.maximum(tsq * inv_m - mean * mean, 0.0)
        scale = w_ref[...] * jax.lax.rsqrt(var + EPS)
        scale_ref[...] = scale
        shift_ref[...] = b_ref[...] - mean * scale


def _bn_apply_kernel(x_ref, scale_ref, shift_ref, o_ref):
    """Tiled apply pass: y = x * scale + shift (folded affine)."""
    x = x_ref[...].astype(jnp.float32)
    y = x * scale_ref[...][None] + shift_ref[...][None]
    o_ref[...] = y.astype(o_ref.dtype)


def batch_norm_2d1(x, weight, bias, *, force_tiled=False, tile_rows=None):
    """Training-mode BatchNorm of `batch_norm_2d1` on a (T, B, C, H, W) input."""
    T, B, C, H, W = x.shape
    N = T * B
    HW = H * W

    # Free contiguous reshape; no HBM transpose before or after the kernel.
    x3 = x.reshape(N, C, HW)
    w = weight.reshape(C, 1).astype(jnp.float32)
    b = bias.reshape(C, 1).astype(jnp.float32)

    # Channel groups: stats per group are independent; marked "parallel" so
    # v7x's two TensorCores split channels when Cg stays a multiple of 8.
    G = 2 if (C % 16 == 0) else 1
    Cg = C // G

    # VMEM footprint accounting including sublane/lane padding.
    itemsize = x.dtype.itemsize
    sublane = 8 * max(1, 4 // itemsize)          # f32: 8, bf16: 16, int8: 32
    pad_cg = -(-Cg // sublane) * sublane
    pad_hw = -(-HW // 128) * 128
    # TODO(synk): if HW is not a multiple of 128 (e.g. 14x14 maps), output
    # stores become masked vst; a one-time HBM-side pad would restore lane density.
    padded_row_bytes = pad_cg * pad_hw * itemsize
    group_f32_bytes = N * pad_cg * pad_hw * 4    # f32-equivalent per-group slab

    inv_m = 1.0 / float(N * HW)                  # biased-variance denominator

    def _params(sem):
        return pltpu.CompilerParams(dimension_semantics=sem,
                                    vmem_limit_bytes=_VMEM_LIMIT_BYTES)

    # TODO(synk): running_mean / running_var momentum updates of BatchNorm3d2
    # (training-state side effect) are not materialized; only batch stats.

    if (not force_tiled) and group_f32_bytes <= _FAST_PATH_F32_BYTES:
        # -------- fast path: whole per-group slab resident in VMEM ----------
        out = pl.pallas_call(
            functools.partial(_bn_resident_kernel, inv_m=inv_m),
            out_shape=jax.ShapeDtypeStruct((N, C, HW), x.dtype),
            grid=(G,),
            in_specs=[
                pl.BlockSpec((N, Cg, HW), lambda g: (0, g, 0)),
                pl.BlockSpec((Cg, 1), lambda g: (g, 0)),
                pl.BlockSpec((Cg, 1), lambda g: (g, 0)),
            ],
            out_specs=pl.BlockSpec((N, Cg, HW), lambda g: (0, g, 0)),
            compiler_params=_params(("parallel",)),
        )(x3, w, b)
        return out.reshape(T, B, C, H, W)

    # ---------------- tiled path: stats pass + apply pass -------------------
    if tile_rows is None:
        tile_rows = _TILE_TARGET_BYTES // max(padded_row_bytes, 1)
    n_tile = int(min(N, max(1, tile_rows)))
    n_tiles = pl.cdiv(N, n_tile)
    ragged = (N % n_tile) != 0

    stats_kernel = functools.partial(_bn_stats_kernel, inv_m=inv_m, n_rows=N,
                                     n_tile=n_tile, ragged=ragged)
    scale, shift = pl.pallas_call(
        stats_kernel,
        out_shape=(jax.ShapeDtypeStruct((C, 1), jnp.float32),
                   jax.ShapeDtypeStruct((C, 1), jnp.float32)),
        grid=(G, n_tiles),
        in_specs=[
            pl.BlockSpec((n_tile, Cg, HW), lambda g, i: (i, g, 0)),
            pl.BlockSpec((Cg, 1), lambda g, i: (g, 0)),
            pl.BlockSpec((Cg, 1), lambda g, i: (g, 0)),
        ],
        out_specs=(pl.BlockSpec((Cg, 1), lambda g, i: (g, 0)),
                   pl.BlockSpec((Cg, 1), lambda g, i: (g, 0))),
        scratch_shapes=[pltpu.VMEM((Cg, HW), jnp.float32),   # per-lane sum
                        pltpu.VMEM((Cg, HW), jnp.float32)],  # per-lane sumsq
        compiler_params=_params(("parallel", "arbitrary")),
    )(x3, w, b)

    # Apply pass: every (group, row-tile) is independent -> both grid axes are
    # "parallel", so v7x megacore shares the dominant read+write sweep even
    # when C % 16 != 0 (G == 1).  Ragged edge blocks are partially written
    # back by Pallas, so no masking is needed here.
    out = pl.pallas_call(
        _bn_apply_kernel,
        out_shape=jax.ShapeDtypeStruct((N, C, HW), x.dtype),
        grid=(G, n_tiles),
        in_specs=[
            pl.BlockSpec((n_tile, Cg, HW), lambda g, i: (i, g, 0)),
            pl.BlockSpec((Cg, 1), lambda g, i: (g, 0)),
            pl.BlockSpec((Cg, 1), lambda g, i: (g, 0)),
        ],
        out_specs=pl.BlockSpec((n_tile, Cg, HW), lambda g, i: (i, g, 0)),
        compiler_params=_params(("parallel", "parallel")),
    )(x3, scale, shift)
    return out.reshape(T, B, C, H, W)


def _reference(x, weight, bias):
    # Pure-JAX reference: training-mode BatchNorm over axis 2 of (T,B,C,H,W).
    axes = (0, 1, 3, 4)
    mean = jnp.mean(x, axis=axes, keepdims=True)
    var = jnp.mean((x - mean) ** 2, axis=axes, keepdims=True)
    w = weight.reshape(1, 1, -1, 1, 1)
    b = bias.reshape(1, 1, -1, 1, 1)
    return (x - mean) * jax.lax.rsqrt(var + EPS) * w + b


if __name__ == "__main__":
    key = jax.random.PRNGKey(0)
    k1, k2, k3 = jax.random.split(key, 3)

    # Case 1: module-faithful init (weight = 0.2*thresh = 0.1, bias = 0),
    # T = time_window = 3.  Hits the VMEM-resident fast path.
    T, B, C, H, W = 3, 2, 4, 16, 16
    x = jax.random.normal(k1, (T, B, C, H, W), dtype=jnp.float32)
    weight = jnp.full((C,), 0.2 * THRESH, dtype=jnp.float32)
    bias = jnp.zeros((C,), dtype=jnp.float32)

    y = jax.block_until_ready(batch_norm_2d1(x, weight, bias))
    y_ref = _reference(x, weight, bias)
    assert y.shape == x.shape and y.dtype == x.dtype
    assert jnp.allclose(y, y_ref, atol=1e-5, rtol=1e-5), "case 1 (fast) mismatch"

    # Case 2: fast path with two channel groups (C % 16 == 0 -> G = 2) and
    # arbitrary learned affine parameters.
    C2 = 32
    x2 = jax.random.normal(k2, (T, B, C2, H, W), dtype=jnp.float32)
    w2 = jax.random.normal(k3, (C2,), dtype=jnp.float32) * 0.1 + 0.1
    b2 = jnp.linspace(-0.5, 0.5, C2, dtype=jnp.float32)
    y2 = jax.block_until_ready(batch_norm_2d1(x2, w2, b2))
    assert jnp.allclose(y2, _reference(x2, w2, b2), atol=1e-5, rtol=1e-5), \
        "case 2 (fast, G=2) mismatch"

    # Case 3: force the tiled (stats + apply) path with a ragged row tail
    # (N = 6 rows, tile of 4 -> last tile masked), single channel group.
    y3 = jax.block_until_ready(
        batch_norm_2d1(x, weight, bias, force_tiled=True, tile_rows=4))
    assert jnp.allclose(y3, y_ref, atol=1e-5, rtol=1e-5), "case 3 (tiled) mismatch"

    # Case 4: tiled path with G = 2 channel groups and a ragged tail.
    y4 = jax.block_until_ready(
        batch_norm_2d1(x2, w2, b2, force_tiled=True, tile_rows=4))
    assert jnp.allclose(y4, _reference(x2, w2, b2), atol=1e-5, rtol=1e-5), \
        "case 4 (tiled, G=2) mismatch"

    print("KERNEL_OK")
</pallas_src>

<mosaic_0001>
module attributes {stable_mosaic.version = 11 : i64} {
  func.func @_bn_resident_kernel(%arg0: i32, %arg1: memref<6x4x256xf32, #tpu.memory_space<vmem>>, %arg2: memref<4x1xf32, #tpu.memory_space<vmem>>, %arg3: memref<4x1xf32, #tpu.memory_space<vmem>>, %arg4: memref<6x4x256xf32, #tpu.memory_space<vmem>>) attributes {dimension_semantics = [#tpu.dimension_semantics<parallel>], iteration_bounds = array<i64: 1>, scalar_prefetch = 0 : i64, scratch_operands = 0 : i64, tpu.core_type = #tpu.core_type<tc>, window_params = [{transform_indices = @transform_0, window_bounds = array<i64: 6, 4, 256>}, {transform_indices = @transform_1, window_bounds = array<i64: 4, 1>}, {transform_indices = @transform_2, window_bounds = array<i64: 4, 1>}, {transform_indices = @transform_3, window_bounds = array<i64: 6, 4, 256>}]} {
    %c0 = arith.constant 0 : index
    %c0_0 = arith.constant 0 : index
    %c0_1 = arith.constant 0 : index
    %0 = vector.load %arg1[%c0, %c0_0, %c0_1] : memref<6x4x256xf32, #tpu.memory_space<vmem>>, vector<6x4x256xf32>
    %cst = arith.constant dense<0.000000e+00> : vector<6x4xf32>
    %1 = vector.multi_reduction <add>, %0, %cst [2] : vector<6x4x256xf32> to vector<6x4xf32>
    %2 = vector.shape_cast %1 : vector<6x4xf32> to vector<6x4x1xf32>
    %cst_2 = arith.constant dense<0.000000e+00> : vector<4x1xf32>
    %3 = vector.multi_reduction <add>, %2, %cst_2 [0] : vector<6x4x1xf32> to vector<4x1xf32>
    %4 = vector.shape_cast %3 : vector<4x1xf32> to vector<1x4x1xf32>
    %cst_3 = arith.constant 6.51041686E-4 : f32
    %5 = vector.broadcast %cst_3 : f32 to vector<1x4x1xf32>
    %6 = arith.mulf %4, %5 : vector<1x4x1xf32>
    %7 = vector.broadcast %6 : vector<1x4x1xf32> to vector<6x4x256xf32>
    %8 = arith.subf %0, %7 : vector<6x4x256xf32>
    %9 = arith.mulf %8, %8 : vector<6x4x256xf32>
    %cst_4 = arith.constant dense<0.000000e+00> : vector<6x4xf32>
    %10 = vector.multi_reduction <add>, %9, %cst_4 [2] : vector<6x4x256xf32> to vector<6x4xf32>
    %11 = vector.shape_cast %10 : vector<6x4xf32> to vector<6x4x1xf32>
    %cst_5 = arith.constant dense<0.000000e+00> : vector<4x1xf32>
    %12 = vector.multi_reduction <add>, %11, %cst_5 [0] : vector<6x4x1xf32> to vector<4x1xf32>
    %13 = vector.shape_cast %12 : vector<4x1xf32> to vector<1x4x1xf32>
    %cst_6 = arith.constant 6.51041686E-4 : f32
    %14 = vector.broadcast %cst_6 : f32 to vector<1x4x1xf32>
    %15 = arith.mulf %13, %14 : vector<1x4x1xf32>
    %c0_7 = arith.constant 0 : index
    %c0_8 = arith.constant 0 : index
    %16 = vector.load %arg2[%c0_7, %c0_8] : memref<4x1xf32, #tpu.memory_space<vmem>>, vector<4x1xf32>
    %17 = vector.shape_cast %16 : vector<4x1xf32> to vector<1x4x1xf32>
    %cst_9 = arith.constant 9.99999974E-6 : f32
    %18 = vector.broadcast %cst_9 : f32 to vector<1x4x1xf32>
    %19 = arith.addf %15, %18 : vector<1x4x1xf32>
    %20 = math.rsqrt %19 : vector<1x4x1xf32>
    %21 = arith.mulf %17, %20 : vector<1x4x1xf32>
    %22 = vector.broadcast %21 : vector<1x4x1xf32> to vector<6x4x256xf32>
    %23 = arith.mulf %8, %22 : vector<6x4x256xf32>
    %c0_10 = arith.constant 0 : index
    %c0_11 = arith.constant 0 : index
    %24 = vector.load %arg3[%c0_10, %c0_11] : memref<4x1xf32, #tpu.memory_space<vmem>>, vector<4x1xf32>
    %25 = vector.shape_cast %24 : vector<4x1xf32> to vector<1x4x1xf32>
    %26 = vector.broadcast %25 : vector<1x4x1xf32> to vector<6x4x256xf32>
    %27 = arith.addf %23, %26 : vector<6x4x256xf32>
    %c0_12 = arith.constant 0 : index
    %c0_13 = arith.constant 0 : index
    %c0_14 = arith.constant 0 : index
    %28 = vector.load %arg4[%c0_12, %c0_13, %c0_14] : memref<6x4x256xf32, #tpu.memory_space<vmem>>, vector<6x4x256xf32>
    tpu.vector_store %arg4[%c0_12, %c0_13, %c0_14], %27 {strides = array<i32>} : memref<6x4x256xf32, #tpu.memory_space<vmem>>, vector<6x4x256xf32>,
    return
  }
  func.func @transform_0(%arg0: i32) -> (i32, i32, i32) {
    %c0_i32 = arith.constant 0 : i32
    %c0_i32_0 = arith.constant 0 : i32
    %c0_i32_1 = arith.constant 0 : i32
    return %c0_i32, %arg0, %c0_i32_0 : i32, i32, i32
  }
  func.func @transform_1(%arg0: i32) -> (i32, i32) {
    %c0_i32 = arith.constant 0 : i32
    %c0_i32_0 = arith.constant 0 : i32
    return %arg0, %c0_i32 : i32, i32
  }
  func.func @transform_2(%arg0: i32) -> (i32, i32) {
    %c0_i32 = arith.constant 0 : i32
    %c0_i32_0 = arith.constant 0 : i32
    return %arg0, %c0_i32 : i32, i32
  }
  func.func @transform_3(%arg0: i32) -> (i32, i32, i32) {
    %c0_i32 = arith.constant 0 : i32
    %c0_i32_0 = arith.constant 0 : i32
    %c0_i32_1 = arith.constant 0 : i32
    return %c0_i32, %arg0, %c0_i32_0 : i32, i32, i32
  }
}

</mosaic_0001>

<llo_original>
// kernel: tpu_custom_call.1
$region0: #{tpu_custom_call.1}
  #allocation0 [shape = 'u32[]', space=smem, size = 0x4, offset = 0x4, fixed_abs, tag = 'smem constant byte address 0x4 - core index']
  #allocation1 [shape = 'u32[144,128]{1,0:T(1,128)}', space=vmem, size = 0x12000, scoped, tag = 'internal scratch']
  %s0 = inlined_call_operand.hbm [shape: f32[6,4,256], index: 0, kind: input, shape index: {}]
  %s1 = inlined_call_operand.vmem [shape: f32[4,1], index: 1, kind: input, shape index: {}]
  %s2 = inlined_call_operand.vmem [shape: f32[4,1], index: 2, kind: input, shape index: {}]
  %s3 = inlined_call_operand.hbm [shape: f32[6,4,256], index: 3, kind: output, shape index: {}]
  %s4 = sld [smem:[#allocation0]]
  $region26: #{tpu_custom_call.1} parent=0
    _
  %s6 = ssub.s32 1, %s4
  %s7 = scalar_select 0, %s6, %s4
  $region1: #{tpu_custom_call.1} parent=0
    #allocation2 [shape = 'u8[24576]{0}', space=vmem, size = 0x6000, scoped, tag = 'input window, operand 0, single buffered']
    #allocation3 [shape = 's32[1]{0}', space=sflag, size = 0x4, scoped, tag = 'scoped memory for tpu_custom_call.1']
    #allocation4 [shape = 's32[1]{0}', space=sflag, size = 0x4, scoped, tag = 'scoped memory for tpu_custom_call.1']
    #allocation5 [shape = 'u8[24576]{0}', space=vmem, size = 0x6000, scoped, tag = 'output window, operand 0, single buffered']
    %8 = vsyncpa [#allocation3], 0
    %9 = vsyncpa [#allocation4], 0
    // Predicated region
    $region2: #{tpu_custom_call.1} parent=1 // pred_check
      _
    $region3: #{tpu_custom_call.1} parent=1 // pred_check_branch
      %11 = sbr.rel (0) target = $region5
    $region4: #{tpu_custom_call.1} parent=1 // pred_region
      %s13 = ssub.s32 768, 768
      %14 = vsyncadd [#allocation3], %s13
      %s15 = sshll.u32 [#allocation2], 4
      %s16 = int_to_ptr.vmem [resolvable:$true] %s15
      %21 = dma.hbm_to_vmem [thread:$0]  %s0, 768, %s16, [#allocation3], 128, 128, 8
    $region5: #{tpu_custom_call.1} parent=1 // pred_fallthru
      _
    // Predicated region
    $region6: #{tpu_custom_call.1} parent=1 // pred_check
      _
    $region7: #{tpu_custom_call.1} parent=1 // pred_check_branch
      %23 = sbr.rel (0) target = $region9
    $region8: #{tpu_custom_call.1} parent=1 // pred_region
      _
    $region9: #{tpu_custom_call.1} parent=1 // pred_fallthru
      _
    // Predicated region
    $region10: #{tpu_custom_call.1} parent=1 // pred_check
      _
    $region11: #{tpu_custom_call.1} parent=1 // pred_check_branch
      %25 = sbr.rel (0) target = $region13
    $region12: #{tpu_custom_call.1} parent=1 // pred_region
      _
    $region13: #{tpu_custom_call.1} parent=1 // pred_fallthru
      _
    // Predicated region
    $region14: #{tpu_custom_call.1} parent=1 // pred_check
      _
    $region15: #{tpu_custom_call.1} parent=1 // pred_check_branch
      %27 = sbr.rel (0) target = $region17
    $region16: #{tpu_custom_call.1} parent=1 // pred_region
      %28 = dma.done [#allocation3], 768
    $region17: #{tpu_custom_call.1} parent=1 // pred_fallthru
      _
    %v29 = vld [vmem:[#allocation2] sm:$0xff]
    %v30 = vld [vmem:[#allocation2 + $0x8] sm:$0xff]
    %v31 = vld [vmem:[#allocation2 + $0x10] sm:$0xff]
    %v32 = vld [vmem:[#allocation2 + $0x18] sm:$0xff]
    %v33 = vld [vmem:[#allocation2 + $0x20] sm:$0xff]
    %v34 = vld [vmem:[#allocation2 + $0x28] sm:$0xff]
    %v41 = vcombine.high %v29, %v29
    %v42 = vcombine.high %v30, %v30
    %v43 = vcombine.high %v31, %v31
    %v44 = vcombine.high %v32, %v32
    %v45 = vcombine.high %v33, %v33
    %v46 = vcombine.high %v34, %v34
    %vm53 = vcmask 1043456
    %v54 = vsel %vm53, %v29, 0.0
    %v55 = vsel %vm53, %v41, 0.0
    %v56 = vadd.f32 %v54, %v55
    %57 = vadd.xlane.f32.xlu0 %v56
    %v58 = vpop.xlane.xlu0 %57
    %v59 = vsel %vm53, %v30, 0.0
    %v60 = vsel %vm53, %v42, 0.0
    %v61 = vadd.f32 %v59, %v60
    %62 = vadd.xlane.f32.xlu0 %v61
    %v63 = vpop.xlane.xlu0 %62
    %v64 = vsel %vm53, %v31, 0.0
    %v65 = vsel %vm53, %v43, 0.0
    %v66 = vadd.f32 %v64, %v65
    %67 = vadd.xlane.f32.xlu0 %v66
    %v68 = vpop.xlane.xlu0 %67
    %v69 = vsel %vm53, %v32, 0.0
    %v70 = vsel %vm53, %v44, 0.0
    %v71 = vadd.f32 %v69, %v70
    %72 = vadd.xlane.f32.xlu0 %v71
    %v73 = vpop.xlane.xlu0 %72
    %v74 = vsel %vm53, %v33, 0.0
    %v75 = vsel %vm53, %v45, 0.0
    %v76 = vadd.f32 %v74, %v75
    %77 = vadd.xlane.f32.xlu0 %v76
    %v78 = vpop.xlane.xlu0 %77
    %v79 = vsel %vm53, %v34, 0.0
    %v80 = vsel %vm53, %v46, 0.0
    %v81 = vadd.f32 %v79, %v80
    %82 = vadd.xlane.f32.xlu0 %v81
    %v83 = vpop.xlane.xlu0 %82
    %v84 = vsel %vm53, %v58, 0.0
    %v85 = vsel %vm53, %v63, 0.0
    %v86 = vadd.f32 %v84, %v85
    %v87 = vsel %vm53, %v68, 0.0
    %v88 = vadd.f32 %v86, %v87
    %v89 = vsel %vm53, %v73, 0.0
    %v90 = vadd.f32 %v88, %v89
    %v91 = vsel %vm53, %v78, 0.0
    %v92 = vadd.f32 %v90, %v91
    %v93 = vsel %vm53, %v83, 0.0
    %v94 = vadd.f32 %v92, %v93
    %v95 = vmul.f32 %v94, 0.0006510417
    %v98 = vunpack.c.l.s4 839922192
    %v99 = vunpack.c.0.s8 %v98
    %v100 = vlaneseq
    %v101 = vshrl.u32 %v100, 7
    %v102 = vsub.s32 %v99, %v101
    %v103 = vrot.slane %v95, %v102
    %v105 = vsub.f32 %v29, %v103
    %v106 = vsub.f32 %v30, %v103
    %v107 = vsub.f32 %v31, %v103
    %v108 = vsub.f32 %v32, %v103
    %v109 = vsub.f32 %v33, %v103
    %v110 = vsub.f32 %v34, %v103
    %v111 = vmul.f32 %v105, %v105
    %v112 = vmul.f32 %v106, %v106
    %v113 = vmul.f32 %v107, %v107
    %v114 = vmul.f32 %v108, %v108
    %v115 = vmul.f32 %v109, %v109
    %v116 = vmul.f32 %v110, %v110
    %v123 = vcombine.high %v111, %v111
    %v124 = vcombine.high %v112, %v112
    %v125 = vcombine.high %v113, %v113
    %v126 = vcombine.high %v114, %v114
    %v127 = vcombine.high %v115, %v115
    %v128 = vcombine.high %v116, %v116
    %v135 = vsel %vm53, %v111, 0.0
    %v136 = vsel %vm53, %v123, 0.0
    %v137 = vadd.f32 %v135, %v136
    %138 = vadd.xlane.f32.xlu0 %v137
    %v139 = vpop.xlane.xlu0 %138
    %v140 = vsel %vm53, %v112, 0.0
    %v141 = vsel %vm53, %v124, 0.0
    %v142 = vadd.f32 %v140, %v141
    %143 = vadd.xlane.f32.xlu0 %v142
    %v144 = vpop.xlane.xlu0 %143
    %v145 = vsel %vm53, %v113, 0.0
    %v146 = vsel %vm53, %v125, 0.0
    %v147 = vadd.f32 %v145, %v146
    %148 = vadd.xlane.f32.xlu0 %v147
    %v149 = vpop.xlane.xlu0 %148
    %v150 = vsel %vm53, %v114, 0.0
    %v151 = vsel %vm53, %v126, 0.0
    %v152 = vadd.f32 %v150, %v151
    %153 = vadd.xlane.f32.xlu0 %v152
    %v154 = vpop.xlane.xlu0 %153
    %v155 = vsel %vm53, %v115, 0.0
    %v156 = vsel %vm53, %v127, 0.0
    %v157 = vadd.f32 %v155, %v156
    %158 = vadd.xlane.f32.xlu0 %v157
    %v159 = vpop.xlane.xlu0 %158
    %v160 = vsel %vm53, %v116, 0.0
    %v161 = vsel %vm53, %v128, 0.0
    %v162 = vadd.f32 %v160, %v161
    %163 = vadd.xlane.f32.xlu0 %v162
    %v164 = vpop.xlane.xlu0 %163
    %v165 = vsel %vm53, %v139, 0.0
    %v166 = vsel %vm53, %v144, 0.0
    %v167 = vadd.f32 %v165, %v166
    %v168 = vsel %vm53, %v149, 0.0
    %v169 = vadd.f32 %v167, %v168
    %v170 = vsel %vm53, %v154, 0.0
    %v171 = vadd.f32 %v169, %v170
    %v172 = vsel %vm53, %v159, 0.0
    %v173 = vadd.f32 %v171, %v172
    %v174 = vsel %vm53, %v164, 0.0
    %v175 = vadd.f32 %v173, %v174
    %v176 = vmul.f32 %v175, 0.0006510417
    %v177 = vld [vmem:[%s1] sm:$0xf]
    %v178 = vadd.f32 %v176, 1e-05
    %v179 = vrsqrt.pop %v178
    %v180 = vmul.f32 %v177, %v179
    %182 = vset.pattern.permute.xlu0 0
    %183 = vperm.xlu0 %182, %v180
    %v184 = vpop.permute.xlu0 %183
    %v186 = vunpack.c.l.s4 839922192
    %v187 = vunpack.c.0.s8 %v186
    %v188 = vlaneseq
    %v189 = vshrl.u32 %v188, 7
    %v190 = vsub.s32 %v187, %v189
    %v191 = vrot.slane %v184, %v190
    %v193 = vmul.f32 %v105, %v191
    %v194 = vmul.f32 %v106, %v191
    %v195 = vmul.f32 %v107, %v191
    %v196 = vmul.f32 %v108, %v191
    %v197 = vmul.f32 %v109, %v191
    %v198 = vmul.f32 %v110, %v191
    %v199 = vld [vmem:[%s2] sm:$0xf]
    %201 = vset.pattern.permute.xlu0 0
    %202 = vperm.xlu0 %201, %v199
    %v203 = vpop.permute.xlu0 %202
    %v205 = vunpack.c.l.s4 839922192
    %v206 = vunpack.c.0.s8 %v205
    %v207 = vlaneseq
    %v208 = vshrl.u32 %v207, 7
    %v209 = vsub.s32 %v206, %v208
    %v210 = vrot.slane %v203, %v209
    %v212 = vadd.f32 %v193, %v210
    %v213 = vadd.f32 %v194, %v210
    %v214 = vadd.f32 %v195, %v210
    %v215 = vadd.f32 %v196, %v210
    %v216 = vadd.f32 %v197, %v210
    %v217 = vadd.f32 %v198, %v210
    %218 = vst [vmem:[#allocation5] sm:$0xff] %v212
    %219 = vst [vmem:[#allocation5 + $0x8] sm:$0xff] %v213
    %220 = vst [vmem:[#allocation5 + $0x10] sm:$0xff] %v214
    %221 = vst [vmem:[#allocation5 + $0x18] sm:$0xff] %v215
    %222 = vst [vmem:[#allocation5 + $0x20] sm:$0xff] %v216
    %223 = vst [vmem:[#allocation5 + $0x28] sm:$0xff] %v217
    // Predicated region
    $region18: #{tpu_custom_call.1} parent=1 // pred_check
      _
    $region19: #{tpu_custom_call.1} parent=1 // pred_check_branch
      %225 = sbr.rel (0) target = $region21
    $region20: #{tpu_custom_call.1} parent=1 // pred_region
      %s227 = ssub.s32 768, 768
      %228 = vsyncadd [#allocation4], %s227
      %s229 = sshll.u32 [#allocation5], 4
      %s230 = int_to_ptr.vmem [resolvable:$true] %s229
      %235 = dma.vmem_to_hbm [thread:$0]  %s230, 768, %s3, [#allocation4], 128, 128, 8
    $region21: #{tpu_custom_call.1} parent=1 // pred_fallthru
      _
    // Predicated region
    $region22: #{tpu_custom_call.1} parent=1 // pred_check
      _
    $region23: #{tpu_custom_call.1} parent=1 // pred_check_branch
      %237 = sbr.rel (0) target = $region25
    $region24: #{tpu_custom_call.1} parent=1 // pred_region
      %238 = dma.done [#allocation4], 768
    $region25: #{tpu_custom_call.1} parent=1 // pred_fallthru
      _
    %239 = vsyncpa [#allocation3], 1
    %240 = vsyncpa [#allocation4], 1

</llo_original>
